<compile_context>
chip_gen: v7x
topology: tpu7x:2x2x1
jax: 0.10.0
libtpu: 0.0.40
codegen_flags: <defaults>
</compile_context>

<pallas_src>
import jax
import jax.numpy as jnp
import numpy as np
from jax.experimental import pallas as pl
from jax.experimental.pallas import tpu as pltpu


def _round_up(x, m):
    return (x + m - 1) // m * m


def _prelu(x, alpha):
    return jnp.where(x >= 0, x, alpha * x)


# ----------------------------------------------------------------------------
# Kernel
# ----------------------------------------------------------------------------
def encoder_kernel(a1_ref,                        # SMEM (1,)   PReLU alpha, layer 1
                   seq_ref, adj_ref,              # VMEM (1,N,Fin), (1,N,N)
                   w1_ref, b1_ref,                # VMEM (Fin,H), (1,H)
                   wcat_ref, bcat_ref, acat_ref,  # VMEM (H,OW), (1,OW), (1,OW)
                   out_ref):                      # VMEM (1,N,OW) = [mu | logvar | pad]
    seq = seq_ref[0]                              # (N, Fin)  compute dtype (bf16/f32)
    adj = adj_ref[0]                              # (N, N)
    cd = seq.dtype                                # MXU input dtype
    fin = seq.shape[-1]
    h = w1_ref.shape[-1]

    # ---- GCN 1:  h1 = PReLU(adj @ (seq @ W1) + b1) ---------------------------
    # Reassociate to (adj @ seq) @ W1 when Fin < H (cheaper adj contraction).
    if fin < h:
        asq = jnp.dot(adj, seq, preferred_element_type=jnp.float32)     # (N, Fin)
        z1 = jnp.dot(asq.astype(cd), w1_ref[...],
                     preferred_element_type=jnp.float32) + b1_ref[...]
    else:
        xw = jnp.dot(seq, w1_ref[...], preferred_element_type=jnp.float32)
        z1 = jnp.dot(adj, xw.astype(cd),
                     preferred_element_type=jnp.float32) + b1_ref[...]
    h1 = _prelu(z1, a1_ref[0])                                          # (N, H) f32

    # ---- GCN mu / logvar (fused heads, shared adj @ h1) ----------------------
    # adj @ (h1 @ W) == (adj @ h1) @ W   ->   one adj matmul, one wide matmul.
    ah1 = jnp.dot(adj, h1.astype(cd), preferred_element_type=jnp.float32)  # (N, H)
    z2 = jnp.dot(ah1.astype(cd), wcat_ref[...],
                 preferred_element_type=jnp.float32) + bcat_ref[...]       # (N, OW)
    out_ref[0] = _prelu(z2, acat_ref[...]).astype(out_ref.dtype)


# ----------------------------------------------------------------------------
# One-time preparation (hoisted OUT of the per-forward path)
# ----------------------------------------------------------------------------
def prepare_adj(adj, *, compute_dtype=jnp.bfloat16):
    """Cast the (B,N,N) adjacency to the MXU input dtype ONCE.

    Doing this per forward is a full N^2 HBM read+write pass that can erase the
    entire in-kernel bandwidth saving -- call it at preprocessing time and reuse.
    """
    return adj.astype(compute_dtype)


def prepare_encoder_params(params, *, compute_dtype=jnp.bfloat16):
    """Pack / cast the Encoder parameters once (call at init, not per forward).

    - fuses the mu/logvar heads into one wide matmul (Wcat, bcat, alpha_cat),
    - pads the fused output width to a multiple of 128 lanes (unmasked stores),
      with zero-filled padding weights so padded lanes are exactly 0,
    - casts MXU-input weights to `compute_dtype` (bf16 default).
    """
    H = params["w1"].shape[1]
    H2 = params["wmu"].shape[1]
    out_w = _round_up(2 * H2, 128)
    pad = out_w - 2 * H2

    wcat = jnp.concatenate([params["wmu"], params["wlv"]], axis=1)       # (H, 2*H2)
    bcat = jnp.concatenate([params["bmu"], params["blv"]], axis=1)       # (1, 2*H2)
    acat = jnp.concatenate(
        [jnp.full((1, H2), params["alphas"][1], jnp.float32),
         jnp.full((1, H2), params["alphas"][2], jnp.float32)], axis=1)   # (1, 2*H2)
    if pad:
        wcat = jnp.pad(wcat, ((0, 0), (0, pad)))
        bcat = jnp.pad(bcat, ((0, 0), (0, pad)))
        acat = jnp.pad(acat, ((0, 0), (0, pad)))

    cd = compute_dtype
    return {
        "a1": params["alphas"][0:1],                 # (1,)  SMEM scalar
        "w1": params["w1"].astype(cd),               # (Fin, H)
        "b1": params["b1"],                          # (1, H)   f32
        "wcat": wcat.astype(cd),                     # (H, OW)
        "bcat": bcat,                                # (1, OW)  f32
        "acat": acat,                                # (1, OW)  f32
        "H": H,
        "H2": H2,
        "out_w": out_w,
        "compute_dtype": cd,
    }


# ----------------------------------------------------------------------------
# Forward
# ----------------------------------------------------------------------------
def encoder_forward_fused(seq1, adj_c, prep):
    """Hot path: returns the fused (B, N, out_w) slab = [mu | logvar | 0-pad].

    `adj_c` must already be in prep["compute_dtype"] (use prepare_adj) so no
    extra HBM pass happens here.
    """
    B, N, Fin = seq1.shape
    H, out_w = prep["H"], prep["out_w"]
    cd = prep["compute_dtype"]
    cd_size = jnp.dtype(cd).itemsize

    seq_c = seq1.astype(cd)   # cheap: B*N*Fin, negligible vs the N^2 adj stream

    # --- VMEM budget: double-buffered blocks + weights + f32 temporaries ------
    est = (2 * N * N * cd_size                    # adj block (double-buffered)
           + 2 * N * Fin * cd_size                # seq block
           + 2 * N * out_w * 4                    # output block (f32)
           + 2 * (Fin * H + H * out_w) * cd_size  # weights
           + 2 * (H + 2 * out_w) * 4              # biases / alphas
           + N * (Fin + 2 * H + 2 * out_w) * 4    # h1 / ah1 / z1 / z2 temporaries
           + (2 << 20))                           # slack
    try:
        vmem_cap = int(pltpu.get_tpu_info().vmem_capacity_bytes)
    except Exception:
        vmem_cap = 128 * 1024 * 1024
    vmem_limit = min(max(est, 32 * 1024 * 1024),
                     100 * 1024 * 1024,
                     int(vmem_cap * 0.9))

    # --- advisory cost estimate (mem-bound custom call) ------------------------
    flops = 2 * B * (N * N * (min(Fin, H) + H)        # two adj contractions
                     + N * Fin * H                    # layer-1 linear
                     + N * H * out_w)                 # fused head matmul
    bytes_accessed = (B * (N * N * cd_size            # adj
                           + N * Fin * cd_size        # seq
                           + N * out_w * 4)           # output
                      + (Fin * H + H * out_w) * cd_size
                      + (H + 2 * out_w) * 4)
    cost = pl.CostEstimate(flops=flops, transcendentals=0,
                           bytes_accessed=bytes_accessed)

    grid_spec = pltpu.PrefetchScalarGridSpec(
        num_scalar_prefetch=0,
        grid=(B,),
        in_specs=[
            pl.BlockSpec(memory_space=pltpu.MemorySpace.SMEM),           # alpha1
            pl.BlockSpec((1, N, Fin), lambda b: (b, 0, 0)),              # seq1
            pl.BlockSpec((1, N, N),   lambda b: (b, 0, 0)),              # adj
            pl.BlockSpec((Fin, H),    lambda b: (0, 0)),                 # W1
            pl.BlockSpec((1, H),      lambda b: (0, 0)),                 # b1
            pl.BlockSpec((H, out_w),  lambda b: (0, 0)),                 # Wcat
            pl.BlockSpec((1, out_w),  lambda b: (0, 0)),                 # bcat
            pl.BlockSpec((1, out_w),  lambda b: (0, 0)),                 # alpha cat
        ],
        out_specs=pl.BlockSpec((1, N, out_w), lambda b: (b, 0, 0)),      # [mu|lv|pad]
    )

    return pl.pallas_call(
        encoder_kernel,
        out_shape=jax.ShapeDtypeStruct((B, N, out_w), jnp.float32),
        grid_spec=grid_spec,
        compiler_params=pltpu.CompilerParams(
            dimension_semantics=("parallel",),
            vmem_limit_bytes=vmem_limit),
        cost_estimate=cost,
    )(prep["a1"], seq_c, adj_c, prep["w1"], prep["b1"],
      prep["wcat"], prep["bcat"], prep["acat"])


def encoder_forward(seq1, adj_c, prep):
    """Encoder.forward API: returns (mu, log_var), each (B, N, 2*n_h).

    The split adds one post-kernel slice pass over B*N*2*H2; consumers that can
    take the fused slab should call encoder_forward_fused directly.
    """
    H2 = prep["H2"]
    fused = encoder_forward_fused(seq1, adj_c, prep)
    return fused[..., :H2], fused[..., H2:2 * H2]


# ----------------------------------------------------------------------------
# Pure-JAX reference + init (for validation)
# ----------------------------------------------------------------------------
def encoder_forward_ref(seq1, adj, params):
    def gcn(x, w, b, a):
        out = jnp.einsum("bnm,bmf->bnf", adj, jnp.einsum("bnf,fo->bno", x, w)) + b
        return jnp.where(out >= 0, out, a * out)
    h1 = gcn(seq1, params["w1"], params["b1"], params["alphas"][0])
    mu = gcn(h1, params["wmu"], params["bmu"], params["alphas"][1])
    lv = gcn(h1, params["wlv"], params["blv"], params["alphas"][2])
    return mu, lv


def init_params(key, n_in, n_h):
    """Deterministic parameter init (Xavier-uniform weights, zero biases,
    PReLU alpha = 0.25 as in torch defaults)."""
    def xavier(k, fan_in, fan_out):
        limit = float(np.sqrt(6.0 / (fan_in + fan_out)))
        return jax.random.uniform(k, (fan_in, fan_out), jnp.float32,
                                  minval=-limit, maxval=limit)
    k1, k2, k3 = jax.random.split(key, 3)
    return {
        "w1":  xavier(k1, n_in, n_h),
        "b1":  jnp.zeros((1, n_h), jnp.float32),
        "wmu": xavier(k2, n_h, 2 * n_h),
        "bmu": jnp.zeros((1, 2 * n_h), jnp.float32),
        "wlv": xavier(k3, n_h, 2 * n_h),
        "blv": jnp.zeros((1, 2 * n_h), jnp.float32),
        "alphas": jnp.array([0.25, 0.25, 0.25], jnp.float32),
    }


if __name__ == "__main__":
    B, N, n_in, n_h = 2, 8, 16, 32

    key = jax.random.PRNGKey(0)
    k_seq, k_adj, k_par = jax.random.split(key, 3)

    seq1 = jax.random.normal(k_seq, (B, N, n_in), jnp.float32)
    # symmetric row-normalized dense adjacency (self-loops included)
    raw = (jax.random.uniform(k_adj, (B, N, N)) > 0.5).astype(jnp.float32)
    adj = raw + jnp.transpose(raw, (0, 2, 1)) + jnp.eye(N)[None]
    adj = adj / jnp.sum(adj, axis=-1, keepdims=True)

    params = init_params(k_par, n_in, n_h)
    mu_ref, lv_ref = encoder_forward_ref(seq1, adj, params)

    # ---- default bf16 MXU-input path (f32 accumulation) -----------------------
    prep_bf = prepare_encoder_params(params)              # bf16 default, once
    adj_bf = prepare_adj(adj)                             # cast once, reused
    mu_bf, lv_bf = encoder_forward(seq1, adj_bf, prep_bf)
    jax.block_until_ready((mu_bf, lv_bf))
    np.testing.assert_allclose(np.asarray(mu_bf), np.asarray(mu_ref),
                               rtol=5e-2, atol=5e-2)
    np.testing.assert_allclose(np.asarray(lv_bf), np.asarray(lv_ref),
                               rtol=5e-2, atol=5e-2)

    # ---- f32 path (exact up to reassociation) ---------------------------------
    prep_f32 = prepare_encoder_params(params, compute_dtype=jnp.float32)
    adj_f32 = prepare_adj(adj, compute_dtype=jnp.float32)
    mu, log_var = encoder_forward(seq1, adj_f32, prep_f32)
    jax.block_until_ready((mu, log_var))
    np.testing.assert_allclose(np.asarray(mu), np.asarray(mu_ref),
                               rtol=1e-5, atol=1e-5)
    np.testing.assert_allclose(np.asarray(log_var), np.asarray(lv_ref),
                               rtol=1e-5, atol=1e-5)

    print("KERNEL_OK")
</pallas_src>

<mosaic_0001>
module attributes {stable_mosaic.version = 11 : i64} {
  func.func @encoder_kernel(%arg0: i32, %arg1: memref<1xf32, #tpu.memory_space<smem>>, %arg2: memref<1x8x16xbf16, #tpu.memory_space<vmem>>, %arg3: memref<1x8x8xbf16, #tpu.memory_space<vmem>>, %arg4: memref<16x32xbf16, #tpu.memory_space<vmem>>, %arg5: memref<1x32xf32, #tpu.memory_space<vmem>>, %arg6: memref<32x128xbf16, #tpu.memory_space<vmem>>, %arg7: memref<1x128xf32, #tpu.memory_space<vmem>>, %arg8: memref<1x128xf32, #tpu.memory_space<vmem>>, %arg9: memref<1x8x128xf32, #tpu.memory_space<vmem>>) attributes {dimension_semantics = [#tpu.dimension_semantics<parallel>], iteration_bounds = array<i64: 2>, scalar_prefetch = 0 : i64, scratch_operands = 0 : i64, tpu.core_type = #tpu.core_type<tc>, window_params = [{transform_indices = @transform_0, window_bounds = array<i64: 1>}, {transform_indices = @transform_1, window_bounds = array<i64: 1, 8, 16>}, {transform_indices = @transform_2, window_bounds = array<i64: 1, 8, 8>}, {pipeline_mode = #tpu.pipeline_mode<synchronous>, transform_indices = @transform_3, window_bounds = array<i64: 16, 32>}, {pipeline_mode = #tpu.pipeline_mode<synchronous>, transform_indices = @transform_4, window_bounds = array<i64: 1, 32>}, {pipeline_mode = #tpu.pipeline_mode<synchronous>, transform_indices = @transform_5, window_bounds = array<i64: 32, 128>}, {pipeline_mode = #tpu.pipeline_mode<synchronous>, transform_indices = @transform_6, window_bounds = array<i64: 1, 128>}, {pipeline_mode = #tpu.pipeline_mode<synchronous>, transform_indices = @transform_7, window_bounds = array<i64: 1, 128>}, {transform_indices = @transform_8, window_bounds = array<i64: 1, 8, 128>}]} {
    %c0 = arith.constant 0 : index
    %c0_0 = arith.constant 0 : index
    %c0_1 = arith.constant 0 : index
    %0 = vector.load %arg2[%c0, %c0_0, %c0_1] : memref<1x8x16xbf16, #tpu.memory_space<vmem>>, vector<1x8x16xbf16>
    %1 = vector.shape_cast %0 : vector<1x8x16xbf16> to vector<8x16xbf16>
    %c0_2 = arith.constant 0 : index
    %c0_3 = arith.constant 0 : index
    %c0_4 = arith.constant 0 : index
    %2 = vector.load %arg3[%c0_2, %c0_3, %c0_4] : memref<1x8x8xbf16, #tpu.memory_space<vmem>>, vector<1x8x8xbf16>
    %3 = vector.shape_cast %2 : vector<1x8x8xbf16> to vector<8x8xbf16>
    %cst = arith.constant dense<0.000000e+00> : vector<8x16xf32>
    %4 = tpu.matmul %3, %1, %cst {dimension_numbers = #tpu.dot_dimension_numbers<[1], [0], [0], [1], [0, 0, 1, 1], [], []>} : vector<8x8xbf16>, vector<8x16xbf16>, vector<8x16xf32> -> vector<8x16xf32>
    %5 = arith.truncf %4 : vector<8x16xf32> to vector<8x16xbf16>
    %c0_5 = arith.constant 0 : index
    %c0_6 = arith.constant 0 : index
    %6 = vector.load %arg4[%c0_5, %c0_6] : memref<16x32xbf16, #tpu.memory_space<vmem>>, vector<16x32xbf16>
    %cst_7 = arith.constant dense<0.000000e+00> : vector<8x32xf32>
    %7 = tpu.matmul %5, %6, %cst_7 {dimension_numbers = #tpu.dot_dimension_numbers<[1], [0], [0], [1], [0, 0, 1, 1], [], []>} : vector<8x16xbf16>, vector<16x32xbf16>, vector<8x32xf32> -> vector<8x32xf32>
    %c0_8 = arith.constant 0 : index
    %c0_9 = arith.constant 0 : index
    %8 = vector.load %arg5[%c0_8, %c0_9] : memref<1x32xf32, #tpu.memory_space<vmem>>, vector<1x32xf32>
    %9 = vector.broadcast %8 : vector<1x32xf32> to vector<8x32xf32>
    %10 = arith.addf %7, %9 : vector<8x32xf32>
    %c0_10 = arith.constant 0 : index
    %11 = memref.load %arg1[%c0_10] : memref<1xf32, #tpu.memory_space<smem>>
    %cst_11 = arith.constant 0.000000e+00 : f32
    %12 = vector.broadcast %cst_11 : f32 to vector<8x32xf32>
    %13 = arith.cmpf oge, %10, %12 : vector<8x32xf32>
    %14 = vector.broadcast %11 : f32 to vector<8x32xf32>
    %15 = arith.mulf %14, %10 : vector<8x32xf32>
    %16 = arith.select %13, %10, %15 : vector<8x32xi1>, vector<8x32xf32>
    %17 = arith.truncf %16 : vector<8x32xf32> to vector<8x32xbf16>
    %cst_12 = arith.constant dense<0.000000e+00> : vector<8x32xf32>
    %18 = tpu.matmul %3, %17, %cst_12 {dimension_numbers = #tpu.dot_dimension_numbers<[1], [0], [0], [1], [0, 0, 1, 1], [], []>} : vector<8x8xbf16>, vector<8x32xbf16>, vector<8x32xf32> -> vector<8x32xf32>
    %19 = arith.truncf %18 : vector<8x32xf32> to vector<8x32xbf16>
    %c0_13 = arith.constant 0 : index
    %c0_14 = arith.constant 0 : index
    %20 = vector.load %arg6[%c0_13, %c0_14] : memref<32x128xbf16, #tpu.memory_space<vmem>>, vector<32x128xbf16>
    %cst_15 = arith.constant dense<0.000000e+00> : vector<8x128xf32>
    %21 = tpu.matmul %19, %20, %cst_15 {dimension_numbers = #tpu.dot_dimension_numbers<[1], [0], [0], [1], [0, 0, 1, 1], [], []>} : vector<8x32xbf16>, vector<32x128xbf16>, vector<8x128xf32> -> vector<8x128xf32>
    %c0_16 = arith.constant 0 : index
    %c0_17 = arith.constant 0 : index
    %22 = vector.load %arg7[%c0_16, %c0_17] : memref<1x128xf32, #tpu.memory_space<vmem>>, vector<1x128xf32>
    %23 = vector.broadcast %22 : vector<1x128xf32> to vector<8x128xf32>
    %24 = arith.addf %21, %23 : vector<8x128xf32>
    %c0_18 = arith.constant 0 : index
    %c0_19 = arith.constant 0 : index
    %25 = vector.load %arg8[%c0_18, %c0_19] : memref<1x128xf32, #tpu.memory_space<vmem>>, vector<1x128xf32>
    %cst_20 = arith.constant 0.000000e+00 : f32
    %26 = vector.broadcast %cst_20 : f32 to vector<8x128xf32>
    %27 = arith.cmpf oge, %24, %26 : vector<8x128xf32>
    %28 = vector.broadcast %25 : vector<1x128xf32> to vector<8x128xf32>
    %29 = arith.mulf %28, %24 : vector<8x128xf32>
    %30 = arith.select %27, %24, %29 : vector<8x128xi1>, vector<8x128xf32>
    %c0_21 = arith.constant 0 : index
    %c0_22 = arith.constant 0 : index
    %c0_23 = arith.constant 0 : index
    %31 = vector.load %arg9[%c0_21, %c0_22, %c0_23] : memref<1x8x128xf32, #tpu.memory_space<vmem>>, vector<1x8x128xf32>
    %32 = vector.shape_cast %31 : vector<1x8x128xf32> to vector<8x128xf32>
    %33 = vector.shape_cast %30 : vector<8x128xf32> to vector<1x8x128xf32>
    tpu.vector_store %arg9[%c0_21, %c0_22, %c0_23], %33 {strides = array<i32>} : memref<1x8x128xf32, #tpu.memory_space<vmem>>, vector<1x8x128xf32>,
    return
  }
  func.func @transform_0(%arg0: i32) -> i32 {
    %c0_i32 = arith.constant 0 : i32
    %c0_i32_0 = arith.constant 0 : i32
    return %c0_i32 : i32
  }
  func.func @transform_1(%arg0: i32) -> (i32, i32, i32) {
    %c0_i32 = arith.constant 0 : i32
    %c0_i32_0 = arith.constant 0 : i32
    %c0_i32_1 = arith.constant 0 : i32
    return %arg0, %c0_i32, %c0_i32_0 : i32, i32, i32
  }
  func.func @transform_2(%arg0: i32) -> (i32, i32, i32) {
    %c0_i32 = arith.constant 0 : i32
    %c0_i32_0 = arith.constant 0 : i32
    %c0_i32_1 = arith.constant 0 : i32
    return %arg0, %c0_i32, %c0_i32_0 : i32, i32, i32
  }
  func.func @transform_3(%arg0: i32) -> (i32, i32) {
    %c0_i32 = arith.constant 0 : i32
    %c0_i32_0 = arith.constant 0 : i32
    %c0_i32_1 = arith.constant 0 : i32
    return %c0_i32, %c0_i32_0 : i32, i32
  }
  func.func @transform_4(%arg0: i32) -> (i32, i32) {
    %c0_i32 = arith.constant 0 : i32
    %c0_i32_0 = arith.constant 0 : i32
    %c0_i32_1 = arith.constant 0 : i32
    return %c0_i32, %c0_i32_0 : i32, i32
  }
  func.func @transform_5(%arg0: i32) -> (i32, i32) {
    %c0_i32 = arith.constant 0 : i32
    %c0_i32_0 = arith.constant 0 : i32
    %c0_i32_1 = arith.constant 0 : i32
    return %c0_i32, %c0_i32_0 : i32, i32
  }
  func.func @transform_6(%arg0: i32) -> (i32, i32) {
    %c0_i32 = arith.constant 0 : i32
    %c0_i32_0 = arith.constant 0 : i32
    %c0_i32_1 = arith.constant 0 : i32
    return %c0_i32, %c0_i32_0 : i32, i32
  }
  func.func @transform_7(%arg0: i32) -> (i32, i32) {
    %c0_i32 = arith.constant 0 : i32
    %c0_i32_0 = arith.constant 0 : i32
    %c0_i32_1 = arith.constant 0 : i32
    return %c0_i32, %c0_i32_0 : i32, i32
  }
  func.func @transform_8(%arg0: i32) -> (i32, i32, i32) {
    %c0_i32 = arith.constant 0 : i32
    %c0_i32_0 = arith.constant 0 : i32
    %c0_i32_1 = arith.constant 0 : i32
    return %arg0, %c0_i32, %c0_i32_0 : i32, i32, i32
  }
}

</mosaic_0001>

<llo_original>
// kernel: tpu_custom_call.1
$region0: #{tpu_custom_call.1}
  #allocation0 [shape = 'u32[]', space=smem, size = 0x4, offset = 0x4, fixed_abs, tag = 'smem constant byte address 0x4 - core index']
  #allocation1 [shape = 'u32[144,128]{1,0:T(1,128)}', space=vmem, size = 0x12000, scoped, tag = 'internal scratch']
  #allocation2 [shape = 'f32[1]{0:T(128)S(6)}', space=smem, size = 0x200, scoped, tag = 'scoped memory for tpu_custom_call.1']
  %s0 = inlined_call_operand.<no memory space> [shape: f32[1], index: 0, kind: input, shape index: {}]
  %s1 = inlined_call_operand.hbm [shape: bf16[2,8,16], index: 1, kind: input, shape index: {}]
  %s2 = inlined_call_operand.hbm [shape: bf16[2,8,8], index: 2, kind: input, shape index: {}]
  %s3 = inlined_call_operand.hbm [shape: bf16[16,32], index: 3, kind: input, shape index: {}]
  %s4 = inlined_call_operand.vmem [shape: f32[1,32], index: 4, kind: input, shape index: {}]
  %s5 = inlined_call_operand.vmem [shape: bf16[32,128], index: 5, kind: input, shape index: {}]
  %s6 = inlined_call_operand.vmem [shape: f32[1,128], index: 6, kind: input, shape index: {}]
  %s7 = inlined_call_operand.vmem [shape: f32[1,128], index: 7, kind: input, shape index: {}]
  %s8 = inlined_call_operand.hbm [shape: f32[2,8,128], index: 8, kind: output, shape index: {}]
  %s9 = sld [smem:[#allocation0]]
  $region77: #{tpu_custom_call.1} parent=0
    _
  %s11 = ssub.s32 1, %s9
  %s12 = scalar_select 0, %s11, %s9
  %13 = sst [smem:[#allocation2]] %s0
  $region1: #{tpu_custom_call.1} parent=0
    #allocation3 [shape = 'u8[4096]{0}', space=vmem, size = 0x1000, scoped, tag = 'input window, operand 1']
    #allocation4 [shape = 's32[2]{0}', space=sflag, size = 0x8, scoped, tag = 'scoped memory for tpu_custom_call.1']
    #allocation5 [shape = 's32[2]{0}', space=sflag, size = 0x8, scoped, tag = 'scoped memory for tpu_custom_call.1']
    #allocation6 [shape = 'u8[4096]{0}', space=vmem, size = 0x1000, scoped, tag = 'input window, operand 2']
    #allocation7 [shape = 's32[2]{0}', space=sflag, size = 0x8, scoped, tag = 'scoped memory for tpu_custom_call.1']
    #allocation8 [shape = 'u8[4096]{0}', space=vmem, size = 0x1000, scoped, tag = 'input window, operand 3, single buffered']
    #allocation9 [shape = 'u8[8192]{0}', space=vmem, size = 0x2000, scoped, tag = 'output window, operand 0']
    %14 = vsyncpa [#allocation4], 0
    %s15 = scalar_lea.sflag [#allocation4], 1
    %16 = vsyncpa %s15, 0
    %17 = vsyncpa [#allocation7], 0
    %s18 = scalar_lea.sflag [#allocation7], 1
    %19 = vsyncpa %s18, 0
    %20 = vsyncpa [#allocation5], 0
    %s21 = scalar_lea.sflag [#allocation5], 1
    %22 = vsyncpa %s21, 0
    loop: start=0, step=1, limit=4
    $region2: #{tpu_custom_call.1} parent=1 // loop_pre_header
      _
    $region3: #{tpu_custom_call.1} parent=1 // loop_header
      %s24 = sphi 0, %s28
      %p25 = scmp.ge.s32.totalorder %s24, 4
      %s32 = sphi 0, %s32
      %s34 = sphi 0, %s32
      %s35 = sphi 0, %s34
      %s49 = sphi 0, %s35
      %s55 = sphi 0, %s57
      %s58 = sphi 0, %s55
      %s59 = sphi 0, %s58
      %s75 = sphi 0, %s59
      %s81 = sphi 0, %s83
      %s84 = sphi 0, %s81
      %s85 = sphi 0, %s84
      %s101 = sphi 0, %s85
      %s105 = sphi 0, %s105
      %s107 = sphi 0, %s105
      %s108 = sphi 0, %s107
      %s122 = sphi 0, %s108
      %s126 = sphi 0, %s126
      %s128 = sphi 0, %s126
      %s129 = sphi 0, %s128
      %s143 = sphi 0, %s129
      %s147 = sphi 0, %s147
      %s149 = sphi 0, %s147
      %s150 = sphi 0, %s149
      %s164 = sphi 0, %s150
      %s168 = sphi 0, %s168
      %s170 = sphi 0, %s168
      %s171 = sphi 0, %s170
      %s185 = sphi 0, %s171
      %s189 = sphi 0, %s189
      %s191 = sphi 0, %s189
      %s192 = sphi 0, %s191
      %s206 = sphi 0, %s192
      %s212 = sphi 0, %s214
      %s215 = sphi 0, %s212
      %s216 = sphi 0, %s215
      %s232 = sphi 0, %s216
    $region4: #{tpu_custom_call.1} parent=1 // loop_header_branch
      %27 = sbr.rel (%p25) target = $region8
    $region5: #{tpu_custom_call.1} parent=1 // loop_body
      %s29 = ssub.s32 %s24, 1
      %s30 = ssub.s32 %s24, 2
      %s31 = sadd.s32 %s24, 1
      %s33 = sadd.s32 %s32, 1
      %p36 = scmp.eq.s32.totalorder %s24, 1
      %p37 = scmp.ne.s32.totalorder %s32, %s34
      %p38 = scmp.eq.s32.totalorder %s24, 0
      %p39 = por %p37, %p38
      %p40 = scmp.ne.s32.totalorder %s32, %s34
      %p41 = scmp.eq.s32.totalorder %s29, 1
      %p42 = por %p40, %p41
      %p43 = scmp.ne.s32.totalorder %s34, %s35
      %p44 = scmp.eq.s32.totalorder %s29, 0
      %p45 = por %p43, %p44
      %p46 = scmp.ne.s32.totalorder %s34, %s35
      %p47 = scmp.eq.s32.totalorder %s30, 1
      %p48 = por %p46, %p47
      %p50 = scmp.ne.s32.totalorder %s35, %s49
      %p51 = scmp.eq.s32.totalorder %s30, 0
      %p52 = por %p50, %p51
      %s53 = ssub.s32 %s24, %s31
      %p54 = scmp.eq.s32.totalorder %s53, 0
      %s56 = sadd.s32 %s55, 1
      %s57 = scalar_select %p54, %s55, %s56
      %p60 = pneg %p54
      %p61 = scmp.eq.s32.totalorder %s24, 1
      %p62 = por %p60, %p61
      %p63 = scmp.ne.s32.totalorder %s55, %s58
      %p64 = scmp.eq.s32.totalorder %s24, 0
      %p65 = por %p63, %p64
      %p66 = scmp.ne.s32.totalorder %s55, %s58
      %p67 = scmp.eq.s32.totalorder %s29, 1
      %p68 = por %p66, %p67
      %p69 = scmp.ne.s32.totalorder %s58, %s59
      %p70 = scmp.eq.s32.totalorder %s29, 0
      %p71 = por %p69, %p70
      %p72 = scmp.ne.s32.totalorder %s58, %s59
      %p73 = scmp.eq.s32.totalorder %s30, 1
      %p74 = por %p72, %p73
      %p76 = scmp.ne.s32.totalorder %s59, %s75
      %p77 = scmp.eq.s32.totalorder %s30, 0
      %p78 = por %p76, %p77
      %s79 = ssub.s32 %s24, %s31
      %p80 = scmp.eq.s32.totalorder %s79, 0
      %s82 = sadd.s32 %s81, 1
      %s83 = scalar_select %p80, %s81, %s82
      %p86 = pneg %p80
      %p87 = scmp.eq.s32.totalorder %s24, 1
      %p88 = por %p86, %p87
      %p89 = scmp.ne.s32.totalorder %s81, %s84
      %p90 = scmp.eq.s32.totalorder %s24, 0
      %p91 = por %p89, %p90
      %p92 = scmp.ne.s32.totalorder %s81, %s84
      %p93 = scmp.eq.s32.totalorder %s29, 1
      %p94 = por %p92, %p93
      %p95 = scmp.ne.s32.totalorder %s84, %s85
      %p96 = scmp.eq.s32.totalorder %s29, 0
      %p97 = por %p95, %p96
      %p98 = scmp.ne.s32.totalorder %s84, %s85
      %p99 = scmp.eq.s32.totalorder %s30, 1
      %p100 = por %p98, %p99
      %p102 = scmp.ne.s32.totalorder %s85, %s101
      %p103 = scmp.eq.s32.totalorder %s30, 0
      %p104 = por %p102, %p103
      %s106 = sadd.s32 %s105, 1
      %p109 = scmp.eq.s32.totalorder %s24, 1
      %p110 = scmp.ne.s32.totalorder %s105, %s107
      %p111 = scmp.eq.s32.totalorder %s24, 0
      %p112 = por %p110, %p111
      %p113 = scmp.ne.s32.totalorder %s105, %s107
      %p114 = scmp.eq.s32.totalorder %s29, 1
      %p115 = por %p113, %p114
      %p116 = scmp.ne.s32.totalorder %s107, %s108
      %p117 = scmp.eq.s32.totalorder %s29, 0
      %p118 = por %p116, %p117
      %p119 = scmp.ne.s32.totalorder %s107, %s108
      %p120 = scmp.eq.s32.totalorder %s30, 1
      %p121 = por %p119, %p120
      %p123 = scmp.ne.s32.totalorder %s108, %s122
      %p124 = scmp.eq.s32.totalorder %s30, 0
      %p125 = por %p123, %p124
      %s127 = sadd.s32 %s126, 1
      %p130 = scmp.eq.s32.totalorder %s24, 1
      %p131 = scmp.ne.s32.totalorder %s126, %s128
      %p132 = scmp.eq.s32.totalorder %s24, 0
      %p133 = por %p131, %p132
      %p134 = scmp.ne.s32.totalorder %s126, %s128
      %p135 = scmp.eq.s32.totalorder %s29, 1
      %p136 = por %p134, %p135
      %p137 = scmp.ne.s32.totalorder %s128, %s129
      %p138 = scmp.eq.s32.totalorder %s29, 0
      %p139 = por %p137, %p138
      %p140 = scmp.ne.s32.totalorder %s128, %s129
      %p141 = scmp.eq.s32.totalorder %s30, 1
      %p142 = por %p140, %p141
      %p144 = scmp.ne.s32.totalorder %s129, %s143
      %p145 = scmp.eq.s32.totalorder %s30, 0
      %p146 = por %p144, %p145
      %s148 = sadd.s32 %s147, 1
      %p151 = scmp.eq.s32.totalorder %s24, 1
      %p152 = scmp.ne.s32.totalorder %s147, %s149
      %p153 = scmp.eq.s32.totalorder %s24, 0
      %p154 = por %p152, %p153
      %p155 = scmp.ne.s32.totalorder %s147, %s149
      %p156 = scmp.eq.s32.totalorder %s29, 1
      %p157 = por %p155, %p156
      %p158 = scmp.ne.s32.totalorder %s149, %s150
      %p159 = scmp.eq.s32.totalorder %s29, 0
      %p160 = por %p158, %p159
      %p161 = scmp.ne.s32.totalorder %s149, %s150
      %p162 = scmp.eq.s32.totalorder %s30, 1
      %p163 = por %p161, %p162
      %p165 = scmp.ne.s32.totalorder %s150, %s164
      %p166 = scmp.eq.s32.totalorder %s30, 0
      %p167 = por %p165, %p166
      %s169 = sadd.s32 %s168, 1
      %p172 = scmp.eq.s32.totalorder %s24, 1
      %p173 = scmp.ne.s32.totalorder %s168, %s170
      %p174 = scmp.eq.s32.totalorder %s24, 0
      %p175 = por %p173, %p174
      %p176 = scmp.ne.s32.totalorder %s168, %s170
      %p177 = scmp.eq.s32.totalorder %s29, 1
      %p178 = por %p176, %p177
      %p179 = scmp.ne.s32.totalorder %s170, %s171
      %p180 = scmp.eq.s32.totalorder %s29, 0
      %p181 = por %p179, %p180
      %p182 = scmp.ne.s32.totalorder %s170, %s171
      %p183 = scmp.eq.s32.totalorder %s30, 1
      %p184 = por %p182, %p183
      %p186 = scmp.ne.s32.totalorder %s171, %s185
      %p187 = scmp.eq.s32.totalorder %s30, 0
      %p188 = por %p186, %p187
      %s190 = sadd.s32 %s189, 1
      %p193 = scmp.eq.s32.totalorder %s24, 1
      %p194 = scmp.ne.s32.totalorder %s189, %s191
      %p195 = scmp.eq.s32.totalorder %s24, 0
      %p196 = por %p194, %p195
      %p197 = scmp.ne.s32.totalorder %s189, %s191
      %p198 = scmp.eq.s32.totalorder %s29, 1
      %p199 = por %p197, %p198
      %p200 = scmp.ne.s32.totalorder %s191, %s192
      %p201 = scmp.eq.s32.totalorder %s29, 0
      %p202 = por %p200, %p201
      %p203 = scmp.ne.s32.totalorder %s191, %s192
      %p204 = scmp.eq.s32.totalorder %s30, 1
      %p205 = por %p203, %p204
      %p207 = scmp.ne.s32.totalorder %s192, %s206
      %p208 = scmp.eq.s32.totalorder %s30, 0
      %p209 = por %p207, %p208
      %s210 = ssub.s32 %s24, %s31
      %p211 = scmp.eq.s32.totalorder %s210, 0
      %s213 = sadd.s32 %s212, 1
      %s214 = scalar_select %p211, %s212, %s213
      %p217 = pneg %p211
      %p218 = scmp.eq.s32.totalorder %s24, 1
      %p219 = por %p217, %p218
      %p220 = scmp.ne.s32.totalorder %s212, %s215
      %p221 = scmp.eq.s32.totalorder %s24, 0
      %p222 = por %p220, %p221
      %p223 = scmp.ne.s32.totalorder %s212, %s215
      %p224 = scmp.eq.s32.totalorder %s29, 1
      %p225 = por %p223, %p224
      %p226 = scmp.ne.s32.totalorder %s215, %s216
      %p227 = scmp.eq.s32.totalorder %s29, 0
      %p228 = por %p226, %p227
      %p229 = scmp.ne.s32.totalorder %s215, %s216
      %p230 = scmp.eq.s32.totalorder %s30, 1
      %p231 = por %p229, %p230
      %p233 = scmp.ne.s32.totalorder %s216, %s232
      %p234 = scmp.eq.s32.totalorder %s30, 0
      %p235 = por %p233, %p234
      %p236 = scmp.le.s32.totalorder 1, %s24
      %p237 = scmp.lt.s32.totalorder %s24, 3
      %p238 = pnand %p236, %p237
      %p239 = pneg %p238
      // Predicated region
      $region9: #{tpu_custom_call.1} parent=5 // pred_check
        _
      $region10: #{tpu_custom_call.1} parent=5 // pred_check_branch
        %241 = sbr.rel (%p238) target = $region12
      $region11: #{tpu_custom_call.1} parent=5 // pred_region
        %s242 = ssub.s32 %s24, 1
        // Predicated region
        $region13: #{tpu_custom_call.1} parent=11 // pred_check
          %p243 = pneg %p45
        $region14: #{tpu_custom_call.1} parent=11 // pred_check_branch
          %245 = sbr.rel (%p243) target = $region16
        $region15: #{tpu_custom_call.1} parent=11 // pred_region
          _
        $region16: #{tpu_custom_call.1} parent=11 // pred_fallthru
          _
        // Predicated region
        $region17: #{tpu_custom_call.1} parent=11 // pred_check
          %p246 = pneg %p118
        $region18: #{tpu_custom_call.1} parent=11 // pred_check_branch
          %248 = sbr.rel (%p246) target = $region20
        $region19: #{tpu_custom_call.1} parent=11 // pred_region
          %s250 = ssub.s32 128, 128
          %251 = vsyncadd [#allocation7], %s250
          %s252 = sshll.u32 [#allocation8], 4
          %s253 = int_to_ptr.vmem [resolvable:$true] %s252
          %258 = dma.hbm_to_vmem [thread:$0]  %s3, 128, %s253, [#allocation7], 64, 64, 4
        $region20: #{tpu_custom_call.1} parent=11 // pred_fallthru
          _
        // Predicated region
        $region21: #{tpu_custom_call.1} parent=11 // pred_check
          %p259 = pneg %p139
        $region22: #{tpu_custom_call.1} parent=11 // pred_check_branch
          %261 = sbr.rel (%p259) target = $region24
        $region23: #{tpu_custom_call.1} parent=11 // pred_region
          _
        $region24: #{tpu_custom_call.1} parent=11 // pred_fallthru
          _
        // Predicated region
        $region25: #{tpu_custom_call.1} parent=11 // pred_check
          %p262 = pneg %p160
        $region26: #{tpu_custom_call.1} parent=11 // pred_check_branch
          %264 = sbr.rel (%p262) target = $region28
        $region27: #{tpu_custom_call.1} parent=11 // pred_region
          _
        $region28: #{tpu_custom_call.1} parent=11 // pred_fallthru
          _
        // Predicated region
        $region29: #{tpu_custom_call.1} parent=11 // pred_check
          %p265 = pneg %p181
        $region30: #{tpu_custom_call.1} parent=11 // pred_check_branch
          %267 = sbr.rel (%p265) target = $region32
        $region31: #{tpu_custom_call.1} parent=11 // pred_region
          _
        $region32: #{tpu_custom_call.1} parent=11 // pred_fallthru
          _
        // Predicated region
        $region33: #{tpu_custom_call.1} parent=11 // pred_check
          %p268 = pneg %p202
        $region34: #{tpu_custom_call.1} parent=11 // pred_check_branch
          %270 = sbr.rel (%p268) target = $region36
        $region35: #{tpu_custom_call.1} parent=11 // pred_region
          _
        $region36: #{tpu_custom_call.1} parent=11 // pred_fallthru
          _
      $region12: #{tpu_custom_call.1} parent=5 // pred_fallthru
        _
      %p271 = scmp.lt.s32.totalorder %s24, 2
      // Predicated region
      $region37: #{tpu_custom_call.1} parent=5 // pred_check
        %p272 = pneg %p271
      $region38: #{tpu_custom_call.1} parent=5 // pred_check_branch
        %274 = sbr.rel (%p272) target = $region40
      $region39: #{tpu_custom_call.1} parent=5 // pred_region
        // Predicated region
        $region41: #{tpu_custom_call.1} parent=39 // pred_check
          %p275 = pneg %p65
        $region42: #{tpu_custom_call.1} parent=39 // pred_check_branch
          %277 = sbr.rel (%p275) target = $region44
        $region43: #{tpu_custom_call.1} parent=39 // pred_region
          %s278 = sand.u32 %s55, 1
          %s279 = scalar_lea.sflag [#allocation4], %s278
          %s280 = sand.u32 %s55, 1
          %s281 = smul.addr %s280, 4
          %s282 = scalar_lea.vmem [#allocation3], %s281
          %s284 = ssub.s32 64, 64
          %285 = vsyncadd %s279, %s284
          %s286 = smul.addr %s24, 64
          %s287 = scalar_lea.hbm %s1, %s286
          %s289 = sshll.u32 %s282, 4
          %s290 = int_to_ptr.vmem [resolvable:$true] %s289
          %292 = dma.hbm_to_vmem [thread:$0]  %s287, 64, %s290, %s279
        $region44: #{tpu_custom_call.1} parent=39 // pred_fallthru
          _
        // Predicated region
        $region45: #{tpu_custom_call.1} parent=39 // pred_check
          %p293 = pneg %p91
        $region46: #{tpu_custom_call.1} parent=39 // pred_check_branch
          %295 = sbr.rel (%p293) target = $region48
        $region47: #{tpu_custom_call.1} parent=39 // pred_region
          %s296 = sand.u32 %s24, 1
          %s297 = scalar_lea.sflag [#allocation7], %s296
          %s298 = sand.u32 %s81, 1
          %s299 = smul.addr %s298, 4
          %s300 = scalar_lea.vmem [#allocation6], %s299
          %s302 = ssub.s32 64, 64
          %303 = vsyncadd %s297, %s302
          %s304 = smul.addr %s24, 64
          %s305 = scalar_lea.hbm %s2, %s304
          %s307 = sshll.u32 %s300, 4
          %s308 = int_to_ptr.vmem [resolvable:$true] %s307
          %310 = dma.hbm_to_vmem [thread:$0]  %s305, 64, %s308, %s297
        $region48: #{tpu_custom_call.1} parent=39 // pred_fallthru
          _
      $region40: #{tpu_custom_call.1} parent=5 // pred_fallthru
        _
      %p311 = scmp.le.s32.totalorder 1, %s24
      %p312 = scmp.lt.s32.totalorder %s24, 3
      %p313 = pnand %p311, %p312
      %p314 = pneg %p313
      // Predicated region
      $region49: #{tpu_custom_call.1} parent=5 // pred_check
        _
      $region50: #{tpu_custom_call.1} parent=5 // pred_check_branch
        %316 = sbr.rel (%p313) target = $region52
      $region51: #{tpu_custom_call.1} parent=5 // pred_region
        %s317 = ssub.s32 %s24, 1
        %s318 = sand.u32 %s58, 1
        %s319 = scalar_lea.sflag [#allocation4], %s318
        %s320 = sand.u32 %s58, 1
        %s321 = smul.addr %s320, 4
        %s322 = scalar_lea.vmem [#allocation3], %s321
        // Predicated region
        $region53: #{tpu_custom_call.1} parent=51 // pred_check
          %p323 = pneg %p71
        $region54: #{tpu_custom_call.1} parent=51 // pred_check_branch
          %325 = sbr.rel (%p323) target = $region56
        $region55: #{tpu_custom_call.1} parent=51 // pred_region
          %326 = dma.done %s319, 64
        $region56: #{tpu_custom_call.1} parent=51 // pred_fallthru
          _
        %s327 = sand.u32 %s29, 1
        %s328 = scalar_lea.sflag [#allocation7], %s327
        %s329 = sand.u32 %s84, 1
        %s330 = smul.addr %s329, 4
        %s331 = scalar_lea.vmem [#allocation6], %s330
        // Predicated region
        $region57: #{tpu_custom_call.1} parent=51 // pred_check
          %p332 = pneg %p97
        $region58: #{tpu_custom_call.1} parent=51 // pred_check_branch
          %334 = sbr.rel (%p332) target = $region60
        $region59: #{tpu_custom_call.1} parent=51 // pred_region
          %335 = dma.done %s328, 64
        $region60: #{tpu_custom_call.1} parent=51 // pred_fallthru
          _
        // Predicated region
        $region61: #{tpu_custom_call.1} parent=51 // pred_check
          %p336 = pneg %p118
        $region62: #{tpu_custom_call.1} parent=51 // pred_check_branch
          %338 = sbr.rel (%p336) target = $region64
        $region63: #{tpu_custom_call.1} parent=51 // pred_region
          %339 = dma.done [#allocation7], 128
        $region64: #{tpu_custom_call.1} parent=51 // pred_fallthru
          _
        %p340 = pneg %p45
        %p341 = pneg %p42
        %s342 = sand.u32 %s58, 1
        %s343 = scalar_lea.sflag [#allocation4], %s342
        %s344 = sand.u32 %s58, 1
        %s345 = smul.addr %s344, 4
        %s346 = scalar_lea.vmem [#allocation3], %s345
        %p347 = pneg %p71
        %p348 = pneg %p68
        %s349 = sand.u32 %s29, 1
        %s350 = scalar_lea.sflag [#allocation7], %s349
        %s351 = sand.u32 %s84, 1
        %s352 = smul.addr %s351, 4
        %s353 = scalar_lea.vmem [#allocation6], %s352
        %p354 = pneg %p97
        %p355 = pneg %p94
        %p356 = pneg %p118
        %p357 = pneg %p115
        %p358 = pneg %p139
        %p359 = pneg %p136
        %p360 = pneg %p160
        %p361 = pneg %p157
        %p362 = pneg %p181
        %p363 = pneg %p178
        %p364 = pneg %p202
        %p365 = pneg %p199
        %p366 = pneg %p228
        %p367 = pneg %p225
        %s368 = sand.u32 %s215, 1
        %s369 = scalar_lea.sflag [#allocation5], %s368
        %s370 = sand.u32 %s215, 1
        %s371 = smul.addr %s370, 8
        %s372 = scalar_lea.vmem [#allocation9], %s371
        %v374 = vld [vmem:[%s322] sm:$0xf]
        %v375 = vld [vmem:[%s331] sm:$0xf]
        %vm376 = vcmask 64512
        %v378 = vsel %vm376, %v375, 0
        %vm380 = vcmask 1043456
        %v382 = vsel %vm380, %v374, 0
        %384 = vmatprep.subr.bf16.mxu0 0
        %385 = vmatpush1.bf16.msra.mxu0 %v382
        %386 = vmatprep.subr.bf16.mxu0 0
        %387 = vmatpush1.bf16.msra.mxu0 0
        %388 = vmatprep.subr.bf16.mxu0 0
        %389 = vmatpush1.bf16.msra.mxu0 0
        %390 = vmatprep.subr.bf16.mxu0 0
        %391 = vmatpush1.bf16.msra.mxu0 0
        %392 = vmatprep.subr.bf16.mxu0 0
        %393 = vmatpush1.bf16.msra.mxu0 0
        %394 = vmatprep.subr.bf16.mxu0 0
        %395 = vmatpush1.bf16.msra.mxu0 0
        %396 = vmatprep.subr.bf16.mxu0 0
        %397 = vmatpush1.bf16.msra.mxu0 0
        %398 = vmatprep.subr.bf16.mxu0 0
        %399 = vmatpush1.bf16.msra.mxu0 0
        %400 = vmatprep.subr.bf16.mxu0 0
        %401 = vmatpush1.bf16.msra.mxu0 0
        %402 = vmatprep.subr.bf16.mxu0 0
        %403 = vmatpush1.bf16.msra.mxu0 0
        %404 = vmatprep.subr.bf16.mxu0 0
        %405 = vmatpush1.bf16.msra.mxu0 0
        %406 = vmatprep.subr.bf16.mxu0 0
        %407 = vmatpush1.bf16.msra.mxu0 0
        %408 = vmatprep.subr.bf16.mxu0 0
        %409 = vmatpush1.bf16.msra.mxu0 0
        %410 = vmatprep.subr.bf16.mxu0 0
        %411 = vmatpush1.bf16.msra.mxu0 0
        %412 = vmatprep.subr.bf16.mxu0 0
        %413 = vmatpush1.bf16.msra.mxu0 0
        %414 = vmatprep.subr.bf16.mxu0 0
        %415 = vmatpush1.bf16.msra.mxu0 0
        %416 = vmatprep.mubr.bf16.mxu0 0
        %417 = vmatmul.mubr.bf16.gmra.mrb[0].mxu0 %v378
        %v418 = vpop.f32.mrb[0].mxu0
        %v419 = vadd.f32 0.0, %v418
        %v420 = vpop.f32.mrb[0].mxu0
        %v421 = vpop.f32.mrb[0].mxu0
        %v422 = vpop.f32.mrb[0].mxu0
        %423 = vdwg.mxu0
        %v424 = vpack.c.bf16 %v419, %v419
        %v425 = vld [vmem:[#allocation8] sm:$0xf]
        %v426 = vld [vmem:[#allocation8 + $0x4] sm:$0xf]
        %v427 = vld [vmem:[%s4] sm:$0x1]
        %v429 = vlaneseq
        %v430 = vshrl.u32 %v429, 7
        %v431 = vsub.s32 0, %v430
        %v432 = vrot.slane %v427, %v431
        %v436 = vunpack.c.l.b16 %v425
        %v437 = vunpack.c.l.b16 %v426
        %v438 = vpack.c.b16 %v437, %v436
        %vm440 = vcmask 130048
        %v442 = vsel %vm440, %v424, 0
        %444 = vmatprep.subr.bf16.mxu0 0
        %445 = vmatpush1.bf16.msra.mxu0 %v438
        %446 = vmatprep.subr.bf16.mxu0 0
        %447 = vmatpush1.bf16.msra.mxu0 0
        %448 = vmatprep.subr.bf16.mxu0 0
        %449 = vmatpush1.bf16.msra.mxu0 0
        %450 = vmatprep.subr.bf16.mxu0 0
        %451 = vmatpush1.bf16.msra.mxu0 0
        %452 = vmatprep.subr.bf16.mxu0 0
        %453 = vmatpush1.bf16.msra.mxu0 0
        %454 = vmatprep.subr.bf16.mxu0 0
        %455 = vmatpush1.bf16.msra.mxu0 0
        %456 = vmatprep.subr.bf16.mxu0 0
        %457 = vmatpush1.bf16.msra.mxu0 0
        %458 = vmatprep.subr.bf16.mxu0 0
        %459 = vmatpush1.bf16.msra.mxu0 0
        %460 = vmatprep.subr.bf16.mxu0 0
        %461 = vmatpush1.bf16.msra.mxu0 0
        %462 = vmatprep.subr.bf16.mxu0 0
        %463 = vmatpush1.bf16.msra.mxu0 0
        %464 = vmatprep.subr.bf16.mxu0 0
        %465 = vmatpush1.bf16.msra.mxu0 0
        %466 = vmatprep.subr.bf16.mxu0 0
        %467 = vmatpush1.bf16.msra.mxu0 0
        %468 = vmatprep.subr.bf16.mxu0 0
        %469 = vmatpush1.bf16.msra.mxu0 0
        %470 = vmatprep.subr.bf16.mxu0 0
        %471 = vmatpush1.bf16.msra.mxu0 0
        %472 = vmatprep.subr.bf16.mxu0 0
        %473 = vmatpush1.bf16.msra.mxu0 0
        %474 = vmatprep.subr.bf16.mxu0 0
        %475 = vmatpush1.bf16.msra.mxu0 0
        %476 = vmatprep.mubr.bf16.mxu0 0
        %477 = vmatmul.mubr.bf16.gmra.mrb[0].mxu0 %v442
        %v478 = vpop.f32.mrb[0].mxu0
        %v479 = vadd.f32 %v432, %v478
        %v480 = vpop.f32.mrb[0].mxu0
        %v481 = vpop.f32.mrb[0].mxu0
        %v482 = vpop.f32.mrb[0].mxu0
        %483 = vdwg.mxu0
        %s484 = sld [smem:[#allocation2]]
        %vm485 = vcmp.ge.f32.partialorder %v479, 0.0
        %v486 = vstv %s484
        %v487 = vmul.f32 %v486, %v479
        %v488 = vsel %vm485, %v479, %v487
        %v489 = vpack.c.bf16 %v488, %v488
        %v491 = vsel %vm380, %v489, 0
        %493 = vmatprep.subr.bf16.mxu0 0
        %494 = vmatpush1.bf16.msra.mxu0 %v491
        %495 = vmatprep.subr.bf16.mxu0 0
        %496 = vmatpush1.bf16.msra.mxu0 0
        %497 = vmatprep.subr.bf16.mxu0 0
        %498 = vmatpush1.bf16.msra.mxu0 0
        %499 = vmatprep.subr.bf16.mxu0 0
        %500 = vmatpush1.bf16.msra.mxu0 0
        %501 = vmatprep.subr.bf16.mxu0 0
        %502 = vmatpush1.bf16.msra.mxu0 0
        %503 = vmatprep.subr.bf16.mxu0 0
        %504 = vmatpush1.bf16.msra.mxu0 0
        %505 = vmatprep.subr.bf16.mxu0 0
        %506 = vmatpush1.bf16.msra.mxu0 0
        %507 = vmatprep.subr.bf16.mxu0 0
        %508 = vmatpush1.bf16.msra.mxu0 0
        %509 = vmatprep.subr.bf16.mxu0 0
        %510 = vmatpush1.bf16.msra.mxu0 0
        %511 = vmatprep.subr.bf16.mxu0 0
        %512 = vmatpush1.bf16.msra.mxu0 0
        %513 = vmatprep.subr.bf16.mxu0 0
        %514 = vmatpush1.bf16.msra.mxu0 0
        %515 = vmatprep.subr.bf16.mxu0 0
        %516 = vmatpush1.bf16.msra.mxu0 0
        %517 = vmatprep.subr.bf16.mxu0 0
        %518 = vmatpush1.bf16.msra.mxu0 0
        %519 = vmatprep.subr.bf16.mxu0 0
        %520 = vmatpush1.bf16.msra.mxu0 0
        %521 = vmatprep.subr.bf16.mxu0 0
        %522 = vmatpush1.bf16.msra.mxu0 0
        %523 = vmatprep.subr.bf16.mxu0 0
        %524 = vmatpush1.bf16.msra.mxu0 0
        %525 = vmatprep.mubr.bf16.mxu0 0
        %526 = vmatmul.mubr.bf16.gmra.mrb[0].mxu0 %v378
        %v527 = vpop.f32.mrb[0].mxu0
        %v528 = vadd.f32 0.0, %v527
        %v529 = vpop.f32.mrb[0].mxu0
        %v530 = vpop.f32.mrb[0].mxu0
        %v531 = vpop.f32.mrb[0].mxu0
        %532 = vdwg.mxu0
        %v533 = vpack.c.bf16 %v528, %v528
        %v534 = vld [vmem:[%s5] sm:$0xf]
        %v535 = vld [vmem:[%s5 + $0x4] sm:$0xf]
        %v536 = vld [vmem:[%s5 + $0x8] sm:$0xf]
        %v537 = vld [vmem:[%s5 + $0xc] sm:$0xf]
        %v538 = vld [vmem:[%s6] sm:$0x1]
        %v540 = vlaneseq
        %v541 = vshrl.u32 %v540, 7
        %v542 = vsub.s32 0, %v541
        %v543 = vrot.slane %v538, %v542
        %v549 = vunpack.c.l.b16 %v534
        %v550 = vunpack.c.l.b16 %v535
        %v551 = vunpack.c.l.b16 %v536
        %v552 = vunpack.c.l.b16 %v537
        %v553 = vpack.c.b16 %v550, %v549
        %v554 = vpack.c.b16 %v552, %v551
        %vm557 = vcmask 261120
        %v559 = vsel %vm557, %v533, 0
        %561 = vmatprep.subr.bf16.mxu0 0
        %562 = vmatpush1.bf16.msra.mxu0 %v553
        %563 = vmatprep.subr.bf16.mxu0 0
        %564 = vmatpush1.bf16.msra.mxu0 %v554
        %565 = vmatprep.subr.bf16.mxu0 0
        %566 = vmatpush1.bf16.msra.mxu0 0
        %567 = vmatprep.subr.bf16.mxu0 0
        %568 = vmatpush1.bf16.msra.mxu0 0
        %569 = vmatprep.subr.bf16.mxu0 0
        %570 = vmatpush1.bf16.msra.mxu0 0
        %571 = vmatprep.subr.bf16.mxu0 0
        %572 = vmatpush1.bf16.msra.mxu0 0
        %573 = vmatprep.subr.bf16.mxu0 0
        %574 = vmatpush1.bf16.msra.mxu0 0
        %575 = vmatprep.subr.bf16.mxu0 0
        %576 = vmatpush1.bf16.msra.mxu0 0
        %577 = vmatprep.subr.bf16.mxu0 0
        %578 = vmatpush1.bf16.msra.mxu0 0
        %579 = vmatprep.subr.bf16.mxu0 0
        %580 = vmatpush1.bf16.msra.mxu0 0
        %581 = vmatprep.subr.bf16.mxu0 0
        %582 = vmatpush1.bf16.msra.mxu0 0
        %583 = vmatprep.subr.bf16.mxu0 0
        %584 = vmatpush1.bf16.msra.mxu0 0
        %585 = vmatprep.subr.bf16.mxu0 0
        %586 = vmatpush1.bf16.msra.mxu0 0
        %587 = vmatprep.subr.bf16.mxu0 0
        %588 = vmatpush1.bf16.msra.mxu0 0
        %589 = vmatprep.subr.bf16.mxu0 0
        %590 = vmatpush1.bf16.msra.mxu0 0
        %591 = vmatprep.subr.bf16.mxu0 0
        %592 = vmatpush1.bf16.msra.mxu0 0
        %593 = vmatprep.mubr.bf16.mxu0 0
        %594 = vmatmul.mubr.bf16.gmra.mrb[0].mxu0 %v559
        %v595 = vpop.f32.mrb[0].mxu0
        %v596 = vadd.f32 %v543, %v595
        %v597 = vpop.f32.mrb[0].mxu0
        %v598 = vpop.f32.mrb[0].mxu0
        %v599 = vpop.f32.mrb[0].mxu0
        %600 = vdwg.mxu0
        %v601 = vld [vmem:[%s7] sm:$0x1]
        %vm602 = vcmp.ge.f32.partialorder %v596, 0.0
        %v604 = vlaneseq
        %v605 = vshrl.u32 %v604, 7
        %v606 = vsub.s32 0, %v605
        %v607 = vrot.slane %v601, %v606
        %v609 = vmul.f32 %v607, %v596
        %v610 = vsel %vm602, %v596, %v609
        %611 = vst [vmem:[%s372] sm:$0xff] %v610
        %s612 = sand.u32 %s215, 1
        %s613 = scalar_lea.sflag [#allocation5], %s612
        %s614 = sand.u32 %s215, 1
        %s615 = smul.addr %s614, 8
        %s616 = scalar_lea.vmem [#allocation9], %s615
        // Predicated region
        $region65: #{tpu_custom_call.1} parent=51 // pred_check
          %p617 = pneg %p225
        $region66: #{tpu_custom_call.1} parent=51 // pred_check_branch
          %619 = sbr.rel (%p617) target = $region68
        $region67: #{tpu_custom_call.1} parent=51 // pred_region
          %s621 = ssub.s32 128, 128
          %622 = vsyncadd %s613, %s621
          %s623 = smul.addr %s29, 128
          %s624 = scalar_lea.hbm %s8, %s623
          %s626 = sshll.u32 %s616, 4
          %s627 = int_to_ptr.vmem [resolvable:$true] %s626
          %629 = dma.vmem_to_hbm [thread:$0]  %s627, 128, %s624, %s613
        $region68: #{tpu_custom_call.1} parent=51 // pred_fallthru
          _
      $region52: #{tpu_custom_call.1} parent=5 // pred_fallthru
        _
      %p630 = scmp.le.s32.totalorder 2, %s24
      // Predicated region
      $region69: #{tpu_custom_call.1} parent=5 // pred_check
        %p631 = pneg %p630
      $region70: #{tpu_custom_call.1} parent=5 // pred_check_branch
        %633 = sbr.rel (%p631) target = $region72
      $region71: #{tpu_custom_call.1} parent=5 // pred_region
        %s634 = ssub.s32 %s24, 2
        // Predicated region
        $region73: #{tpu_custom_call.1} parent=71 // pred_check
          %p635 = pneg %p231
        $region74: #{tpu_custom_call.1} parent=71 // pred_check_branch
          %637 = sbr.rel (%p635) target = $region76
        $region75: #{tpu_custom_call.1} parent=71 // pred_region
          %s638 = sand.u32 %s216, 1
          %s639 = scalar_lea.sflag [#allocation5], %s638
          %s640 = sand.u32 %s216, 1
          %s641 = smul.addr %s640, 8
          %s642 = scalar_lea.vmem [#allocation9], %s641
          %643 = dma.done %s639, 128
        $region76: #{tpu_custom_call.1} parent=71 // pred_fallthru
          _
      $region72: #{tpu_custom_call.1} parent=5 // pred_fallthru
        _
    $region6: #{tpu_custom_call.1} parent=1 // loop_footer
      %s28 = sadd.s32 1, %s24
    $region7: #{tpu_custom_call.1} parent=1 // loop_footer_branch
      %23 = sbr.rel target = $region3
    $region8: #{tpu_custom_call.1} parent=1 // loop_exit
      _
    %644 = vsyncpa [#allocation4], 1
    %s645 = scalar_lea.sflag [#allocation4], 1
    %646 = vsyncpa %s645, 1
    %647 = vsyncpa [#allocation7], 1
    %s648 = scalar_lea.sflag [#allocation7], 1
    %649 = vsyncpa %s648, 1
    %650 = vsyncpa [#allocation5], 1
    %s651 = scalar_lea.sflag [#allocation5], 1
    %652 = vsyncpa %s651, 1

</llo_original>
